<compile_context>
chip_gen: v5e
topology: v5e:2x2
jax: 0.10.0
libtpu: 0.0.40
codegen_flags: <defaults>
</compile_context>

<pallas_src>
import functools
import math

import jax
import jax.numpy as jnp
import numpy as np
from jax.experimental import pallas as pl
from jax.experimental.pallas import tpu as pltpu

_NEG_INF = -1e30          # large finite negative; avoids (-inf)-(-inf)=NaN pitfalls
_VMEM_LIMIT = 32 * 1024 * 1024


def _pick_tile(n, cap):
    """Largest tile <= cap that divides n (prefer multiples of 8)."""
    if n <= cap:
        return n
    for t in range(cap, 0, -1):
        if n % t == 0 and t % 8 == 0:
            return t
    for t in range(cap, 0, -1):
        if n % t == 0:
            return t
    return n


# --------------------------------------------------------------------------- #
# 1) QKV projection: qkv[s, h, rows, :] = x[rows, :] @ Wqkv[s, h] + b[s, h]
# --------------------------------------------------------------------------- #
def _qkv_proj_kernel(x_ref, w_ref, b_ref, o_ref):
    # x_ref: (tm, C)  w_ref: (1,1,C,D)  b_ref: (1,1,1,D)  o_ref: (1,1,tm,D)
    acc = jnp.dot(x_ref[...], w_ref[0, 0], preferred_element_type=jnp.float32)
    o_ref[0, 0] = (acc + b_ref[0, 0].astype(jnp.float32)).astype(o_ref.dtype)


# --------------------------------------------------------------------------- #
# 2) Flash attention with online softmax over (batch, head, q-block, kv-block)
# --------------------------------------------------------------------------- #
def _flash_attn_kernel(q_ref, k_ref, v_ref, o_ref, m_sc, l_sc, acc_sc, *, scale):
    qi = pl.program_id(2)
    ki = pl.program_id(3)
    tq = q_ref.shape[2]
    tk = k_ref.shape[2]

    @pl.when(ki == 0)
    def _init():
        m_sc[...] = jnp.full(m_sc.shape, _NEG_INF, jnp.float32)
        l_sc[...] = jnp.zeros(l_sc.shape, jnp.float32)
        acc_sc[...] = jnp.zeros(acc_sc.shape, jnp.float32)

    # Causal block skip: with tq == tk the kv block ki contributes iff ki <= qi.
    @pl.when(ki <= qi)
    def _compute():
        q = q_ref[0, 0]                      # (tq, D)
        k = k_ref[0, 0]                      # (tk, D)
        # Contract the last dims of both operands: no explicit kh.T relayout.
        s = jax.lax.dot_general(
            q, k, (((1,), (1,)), ((), ())),
            preferred_element_type=jnp.float32) * scale           # (tq, tk) f32

        # Causal mask: global_q = qi*tq + row, global_k = ki*tk + col (tq == tk).
        # For strictly-below-diagonal blocks (ki < qi) the predicate is always
        # true, so the where is a cheap no-op there.
        row = jax.lax.broadcasted_iota(jnp.int32, (tq, tk), 0)
        col = jax.lax.broadcasted_iota(jnp.int32, (tq, tk), 1)
        offs = (qi - ki) * tq
        s = jnp.where(row + offs >= col, s, _NEG_INF)

        m_prev = m_sc[...]                                        # (tq, 1)
        m_new = jnp.maximum(m_prev, jnp.max(s, axis=-1, keepdims=True))
        alpha = jnp.exp(m_prev - m_new)
        p = jnp.exp(s - m_new)                                    # (tq, tk) f32
        l_sc[...] = alpha * l_sc[...] + jnp.sum(p, axis=-1, keepdims=True)
        acc_sc[...] = alpha * acc_sc[...] + jnp.dot(
            p.astype(v_ref.dtype), v_ref[0, 0],
            preferred_element_type=jnp.float32)                   # (tq, D)
        m_sc[...] = m_new

    # Diagonal block is the last contributing kv block for this q block.
    @pl.when(ki == qi)
    def _finalize():
        l = l_sc[...]
        inv = pl.reciprocal(l, approx=True)
        inv = inv * (2.0 - l * inv)          # one Newton step -> ~f32 accurate, off the VALU divide path
        o_ref[0] = (acc_sc[...] * inv).astype(o_ref.dtype)   # o_ref block: (1, tq, D)


# --------------------------------------------------------------------------- #
# 3) Output projection with per-head accumulation (H is the reduction axis)
# --------------------------------------------------------------------------- #
def _out_proj_kernel(y_ref, w_ref, b_ref, o_ref, acc_ref):
    h = pl.program_id(1)

    @pl.when(h == 0)
    def _init():
        acc_ref[...] = jnp.broadcast_to(
            b_ref[...].astype(jnp.float32), acc_ref.shape)

    acc_ref[...] += jnp.dot(y_ref[0], w_ref[0],
                            preferred_element_type=jnp.float32)

    @pl.when(h == pl.num_programs(1) - 1)
    def _finalize():
        o_ref[...] = acc_ref[...].astype(o_ref.dtype)


# --------------------------------------------------------------------------- #
# Wrapper
# --------------------------------------------------------------------------- #
def causal_self_attention(x, wqkv, bqkv, wproj, bproj, *, n_head,
                          compute_dtype=jnp.bfloat16,
                          q_block=128, m_block=256):
    """x: (B, T, C); wqkv: (C, 3C); bqkv: (3C,); wproj: (C, C); bproj: (C,)."""
    B, T, C = x.shape
    assert C % n_head == 0
    H = n_head
    D = C // H
    BT = B * T

    # Tile sizes: 128-multiples suit the MXU; keep <=256 so double-buffered
    # tiles stay well inside v7x's 64 MiB VMEM (q_block/m_block can be raised to
    # 256 for v6e).
    tq = _pick_tile(T, q_block)
    tk = tq                                   # causal block skip assumes tq == tk
    tm = _pick_tile(BT, m_block)
    nTq = T // tq
    assert tq == T or tq % 8 == 0
    assert tm == BT or tm % 8 == 0

    out_dtype = x.dtype
    f32 = jnp.float32
    itemsize = jnp.dtype(compute_dtype).itemsize

    # Host-side layout plumbing (one-time): per-head weight blocks so every kernel
    # tile is a lane-dense rectangle; biases stay f32 and are added post-matmul.
    # TODO(synk): for very large C, additionally tile Wqkv/Wproj over their output
    # columns with an extra grid axis.
    x2 = x.reshape(BT, C).astype(compute_dtype)
    wqkv_r = wqkv.reshape(C, 3, H, D).transpose(1, 2, 0, 3).astype(compute_dtype)  # (3,H,C,D)
    bqkv_r = bqkv.reshape(3, H, 1, D).astype(f32)
    wproj_r = wproj.reshape(H, D, C).astype(compute_dtype)                         # (H,D,C)
    bproj_r = bproj.reshape(1, C).astype(f32)

    # ---- 1) QKV projection -> (3, H, B*T, D). Grid ordered (m, s, h) so the x
    #         tile stays resident in VMEM across the 3*H weight blocks.
    qkv = pl.pallas_call(
        _qkv_proj_kernel,
        out_shape=jax.ShapeDtypeStruct((3, H, BT, D), compute_dtype),
        grid_spec=pltpu.PrefetchScalarGridSpec(
            num_scalar_prefetch=0,
            grid=(BT // tm, 3, H),
            in_specs=[
                pl.BlockSpec((tm, C), lambda m, s, h: (m, 0)),
                pl.BlockSpec((1, 1, C, D), lambda m, s, h: (s, h, 0, 0)),
                pl.BlockSpec((1, 1, 1, D), lambda m, s, h: (s, h, 0, 0)),
            ],
            out_specs=pl.BlockSpec((1, 1, tm, D), lambda m, s, h: (s, h, m, 0)),
        ),
        compiler_params=pltpu.CompilerParams(
            dimension_semantics=("parallel", "parallel", "parallel"),
            vmem_limit_bytes=_VMEM_LIMIT),
        cost_estimate=pl.CostEstimate(
            flops=2 * BT * C * 3 * C,
            transcendentals=0,
            bytes_accessed=(4 * BT * C + 3 * C * C) * itemsize),
    )(x2, wqkv_r, bqkv_r)

    # ---- 2) Flash attention -> y laid out (H, B*T, D).
    flash = functools.partial(_flash_attn_kernel, scale=1.0 / math.sqrt(D))
    y = pl.pallas_call(
        flash,
        out_shape=jax.ShapeDtypeStruct((H, BT, D), compute_dtype),
        grid_spec=pltpu.PrefetchScalarGridSpec(
            num_scalar_prefetch=0,
            grid=(B, H, T // tq, T // tk),
            in_specs=[
                pl.BlockSpec((1, 1, tq, D),
                             lambda b, h, qi, ki: (0, h, b * nTq + qi, 0)),
                pl.BlockSpec((1, 1, tk, D),
                             lambda b, h, qi, ki: (1, h, b * nTq + ki, 0)),
                pl.BlockSpec((1, 1, tk, D),
                             lambda b, h, qi, ki: (2, h, b * nTq + ki, 0)),
            ],
            out_specs=pl.BlockSpec((1, tq, D),
                                   lambda b, h, qi, ki: (h, b * nTq + qi, 0)),
            scratch_shapes=[
                pltpu.VMEM((tq, 1), jnp.float32),    # running max m
                pltpu.VMEM((tq, 1), jnp.float32),    # running denom l
                pltpu.VMEM((tq, D), jnp.float32),    # f32 output accumulator
            ],
        ),
        compiler_params=pltpu.CompilerParams(
            dimension_semantics=("parallel", "parallel", "parallel", "arbitrary"),
            vmem_limit_bytes=_VMEM_LIMIT),
        cost_estimate=pl.CostEstimate(
            flops=2 * B * H * T * T * D,             # causal ~ half of dense
            transcendentals=B * H * T * T // 2,
            bytes_accessed=4 * B * T * C * itemsize),
    )(qkv, qkv, qkv)

    # ---- 3) Output projection: out[rows, :] = sum_h y[h, rows, :] @ Wproj[h] + b.
    out2 = pl.pallas_call(
        _out_proj_kernel,
        out_shape=jax.ShapeDtypeStruct((BT, C), out_dtype),
        grid_spec=pltpu.PrefetchScalarGridSpec(
            num_scalar_prefetch=0,
            grid=(BT // tm, H),
            in_specs=[
                pl.BlockSpec((1, tm, D), lambda m, h: (h, m, 0)),
                pl.BlockSpec((1, D, C), lambda m, h: (h, 0, 0)),
                pl.BlockSpec((1, C), lambda m, h: (0, 0)),
            ],
            out_specs=pl.BlockSpec((tm, C), lambda m, h: (m, 0)),
            scratch_shapes=[pltpu.VMEM((tm, C), jnp.float32)],
        ),
        compiler_params=pltpu.CompilerParams(
            dimension_semantics=("parallel", "arbitrary"),
            vmem_limit_bytes=_VMEM_LIMIT),
        cost_estimate=pl.CostEstimate(
            flops=2 * BT * C * C,
            transcendentals=0,
            bytes_accessed=(2 * BT * C + C * C) * itemsize),
    )(y, wproj_r, bproj_r)

    return out2.reshape(B, T, C)


# --------------------------------------------------------------------------- #
# Pure-JAX reference
# --------------------------------------------------------------------------- #
def _reference(x, wqkv, bqkv, wproj, bproj, n_head):
    B, T, C = x.shape
    D = C // n_head
    qkv = x @ wqkv + bqkv
    q, k, v = jnp.split(qkv, 3, axis=-1)
    q = q.reshape(B, T, n_head, D).transpose(0, 2, 1, 3)
    k = k.reshape(B, T, n_head, D).transpose(0, 2, 1, 3)
    v = v.reshape(B, T, n_head, D).transpose(0, 2, 1, 3)
    att = (q @ jnp.swapaxes(k, -1, -2)) / math.sqrt(D)
    mask = jnp.tril(jnp.ones((T, T), bool))
    att = jnp.where(mask[None, None], att, -jnp.inf)
    att = jax.nn.softmax(att, axis=-1)
    y = (att @ v).transpose(0, 2, 1, 3).reshape(B, T, C)
    return y @ wproj + bproj


if __name__ == "__main__":
    # Small shapes consistent with the module (n_embed % n_head == 0).
    B, T, C, H = 2, 8, 32, 4
    key = jax.random.PRNGKey(0)
    kx, kw1, kb1, kw2, kb2 = jax.random.split(key, 5)
    x = jax.random.normal(kx, (B, T, C), jnp.float32)
    wqkv = jax.random.normal(kw1, (C, 3 * C), jnp.float32) * 0.02
    bqkv = jax.random.normal(kb1, (3 * C,), jnp.float32) * 0.02
    wproj = jax.random.normal(kw2, (C, C), jnp.float32) * 0.02
    bproj = jax.random.normal(kb2, (C,), jnp.float32) * 0.02

    ref = _reference(x, wqkv, bqkv, wproj, bproj, H)

    # f32 MXU path: tight correctness check.
    out_f32 = causal_self_attention(x, wqkv, bqkv, wproj, bproj,
                                    n_head=H, compute_dtype=jnp.float32)
    out_f32 = jax.block_until_ready(out_f32)
    np.testing.assert_allclose(np.asarray(out_f32), np.asarray(ref),
                               atol=1e-4, rtol=1e-4)

    # bf16 MXU path (production default): looser tolerance.
    out_bf16 = causal_self_attention(x, wqkv, bqkv, wproj, bproj,
                                     n_head=H, compute_dtype=jnp.bfloat16)
    out_bf16 = jax.block_until_ready(out_bf16)
    np.testing.assert_allclose(np.asarray(out_bf16), np.asarray(ref),
                               atol=2e-2, rtol=1e-1)

    # Multi-block grid: exercises causal block skip + online-softmax accumulation.
    B2, T2, C2, H2 = 2, 256, 128, 2
    k2 = jax.random.split(jax.random.PRNGKey(1), 5)
    x2 = jax.random.normal(k2[0], (B2, T2, C2), jnp.float32)
    wqkv2 = jax.random.normal(k2[1], (C2, 3 * C2), jnp.float32) * 0.02
    bqkv2 = jax.random.normal(k2[2], (3 * C2,), jnp.float32) * 0.02
    wproj2 = jax.random.normal(k2[3], (C2, C2), jnp.float32) * 0.02
    bproj2 = jax.random.normal(k2[4], (C2,), jnp.float32) * 0.02
    ref2 = _reference(x2, wqkv2, bqkv2, wproj2, bproj2, H2)
    out2 = causal_self_attention(x2, wqkv2, bqkv2, wproj2, bproj2,
                                 n_head=H2, compute_dtype=jnp.float32)
    out2 = jax.block_until_ready(out2)
    np.testing.assert_allclose(np.asarray(out2), np.asarray(ref2),
                               atol=2e-3, rtol=1e-2)

    print("KERNEL_OK")
</pallas_src>

<mosaic_0001>
module attributes {stable_mosaic.version = 11 : i64} {
  func.func @_qkv_proj_kernel(%arg0: i32, %arg1: i32, %arg2: i32, %arg3: memref<16x32xf32, #tpu.memory_space<vmem>>, %arg4: memref<1x1x32x8xf32, #tpu.memory_space<vmem>>, %arg5: memref<1x1x1x8xf32, #tpu.memory_space<vmem>>, %arg6: memref<1x1x16x8xf32, #tpu.memory_space<vmem>>) attributes {dimension_semantics = [#tpu.dimension_semantics<parallel>, #tpu.dimension_semantics<parallel>, #tpu.dimension_semantics<parallel>], iteration_bounds = array<i64: 1, 3, 4>, scalar_prefetch = 0 : i64, scratch_operands = 0 : i64, tpu.core_type = #tpu.core_type<tc>, window_params = [{transform_indices = @transform_0, window_bounds = array<i64: 16, 32>}, {transform_indices = @transform_1, window_bounds = array<i64: 1, 1, 32, 8>}, {transform_indices = @transform_2, window_bounds = array<i64: 1, 1, 1, 8>}, {transform_indices = @transform_3, window_bounds = array<i64: 1, 1, 16, 8>}]} {
    %c0 = arith.constant 0 : index
    %c0_0 = arith.constant 0 : index
    %0 = vector.load %arg3[%c0, %c0_0] : memref<16x32xf32, #tpu.memory_space<vmem>>, vector<16x32xf32>
    %c0_1 = arith.constant 0 : index
    %c0_2 = arith.constant 0 : index
    %c0_3 = arith.constant 0 : index
    %c0_4 = arith.constant 0 : index
    %1 = vector.load %arg4[%c0_1, %c0_2, %c0_3, %c0_4] : memref<1x1x32x8xf32, #tpu.memory_space<vmem>>, vector<1x1x32x8xf32>
    %2 = vector.shape_cast %1 : vector<1x1x32x8xf32> to vector<32x8xf32>
    %cst = arith.constant dense<0.000000e+00> : vector<16x8xf32>
    %3 = tpu.matmul %0, %2, %cst {dimension_numbers = #tpu.dot_dimension_numbers<[1], [0], [0], [1], [0, 0, 1, 1], [], []>} : vector<16x32xf32>, vector<32x8xf32>, vector<16x8xf32> -> vector<16x8xf32>
    %c0_5 = arith.constant 0 : index
    %c0_6 = arith.constant 0 : index
    %c0_7 = arith.constant 0 : index
    %c0_8 = arith.constant 0 : index
    %4 = vector.load %arg5[%c0_5, %c0_6, %c0_7, %c0_8] : memref<1x1x1x8xf32, #tpu.memory_space<vmem>>, vector<1x1x1x8xf32>
    %5 = vector.shape_cast %4 : vector<1x1x1x8xf32> to vector<1x8xf32>
    %6 = vector.broadcast %5 : vector<1x8xf32> to vector<16x8xf32>
    %7 = arith.addf %3, %6 : vector<16x8xf32>
    %c0_9 = arith.constant 0 : index
    %c0_10 = arith.constant 0 : index
    %c0_11 = arith.constant 0 : index
    %c0_12 = arith.constant 0 : index
    %8 = vector.load %arg6[%c0_9, %c0_10, %c0_11, %c0_12] : memref<1x1x16x8xf32, #tpu.memory_space<vmem>>, vector<1x1x16x8xf32>
    %9 = vector.shape_cast %8 : vector<1x1x16x8xf32> to vector<16x8xf32>
    %10 = vector.shape_cast %7 : vector<16x8xf32> to vector<1x1x16x8xf32>
    tpu.vector_store %arg6[%c0_9, %c0_10, %c0_11, %c0_12], %10 {strides = array<i32>} : memref<1x1x16x8xf32, #tpu.memory_space<vmem>>, vector<1x1x16x8xf32>,
    return
  }
  func.func @transform_0(%arg0: i32, %arg1: i32, %arg2: i32) -> (i32, i32) {
    %c0_i32 = arith.constant 0 : i32
    %c0_i32_0 = arith.constant 0 : i32
    return %arg0, %c0_i32 : i32, i32
  }
  func.func @transform_1(%arg0: i32, %arg1: i32, %arg2: i32) -> (i32, i32, i32, i32) {
    %c0_i32 = arith.constant 0 : i32
    %c0_i32_0 = arith.constant 0 : i32
    %c0_i32_1 = arith.constant 0 : i32
    return %arg1, %arg2, %c0_i32, %c0_i32_0 : i32, i32, i32, i32
  }
  func.func @transform_2(%arg0: i32, %arg1: i32, %arg2: i32) -> (i32, i32, i32, i32) {
    %c0_i32 = arith.constant 0 : i32
    %c0_i32_0 = arith.constant 0 : i32
    %c0_i32_1 = arith.constant 0 : i32
    return %arg1, %arg2, %c0_i32, %c0_i32_0 : i32, i32, i32, i32
  }
  func.func @transform_3(%arg0: i32, %arg1: i32, %arg2: i32) -> (i32, i32, i32, i32) {
    %c0_i32 = arith.constant 0 : i32
    %c0_i32_0 = arith.constant 0 : i32
    return %arg1, %arg2, %arg0, %c0_i32 : i32, i32, i32, i32
  }
}

</mosaic_0001>

<llo_original>
// kernel: tpu_custom_call.1
$region0: #{tpu_custom_call.1}
  #allocation0 [shape = 'u32[]', space=smem, size = 0x4, offset = 0x4, fixed_abs, tag = 'smem constant byte address 0x4 - core index']
  #allocation1 [shape = 'u32[72,128]{1,0:T(1,128)}', space=vmem, size = 0x9000, scoped, tag = 'internal scratch']
  %s0 = inlined_call_operand.vmem [shape: f32[16,32], index: 0, kind: input, shape index: {}]
  %s1 = inlined_call_operand.vmem [shape: f32[3,4,32,8], index: 1, kind: input, shape index: {}]
  %s2 = inlined_call_operand.vmem [shape: f32[3,4,1,8], index: 2, kind: input, shape index: {}]
  %s3 = inlined_call_operand.vmem [shape: f32[3,4,16,8], index: 3, kind: output, shape index: {}]
  %s4 = sld [smem:[#allocation0]]
  $region45: #{tpu_custom_call.1} parent=0
    _
  %s6 = ssub.s32 1, %s4
  %s7 = scalar_select 0, %s6, %s4
  loop: start=0, step=1, limit=14
  $region2: #{tpu_custom_call.1} parent=0 // loop_pre_header
    _
  $region3: #{tpu_custom_call.1} parent=0 // loop_header
    %s9 = sphi 0, %s13
    %p10 = scmp.ge.s32.totalorder %s9, 14
    %s16 = sphi 0, %s35
    %s17 = sphi 0, %s31
    %s18 = sphi 0, %s27
    %s19 = sphi 0, %s16
    %s20 = sphi 0, %s17
    %s21 = sphi 0, %s18
    %s22 = sphi 0, %s19
    %s23 = sphi 0, %s20
    %s24 = sphi 0, %s21
    %s38 = sphi 0, %s40
    %s41 = sphi 0, %s38
    %s42 = sphi 0, %s41
    %s58 = sphi 0, %s42
    %s66 = sphi 0, %s68
    %s69 = sphi 0, %s66
    %s70 = sphi 0, %s69
    %s86 = sphi 0, %s70
    %s94 = sphi 0, %s96
    %s97 = sphi 0, %s94
    %s98 = sphi 0, %s97
    %s114 = sphi 0, %s98
    %s124 = sphi 0, %s126
    %s127 = sphi 0, %s124
    %s128 = sphi 0, %s127
    %s144 = sphi 0, %s128
  $region4: #{tpu_custom_call.1} parent=0 // loop_header_branch
    %12 = sbr.rel (%p10) target = $region8
  $region5: #{tpu_custom_call.1} parent=0 // loop_body
    %s14 = ssub.s32 %s9, 1
    %s15 = ssub.s32 %s9, 2
    %s25 = sadd.s32 1, %s18
    %p26 = scmp.ge.s32.totalorder %s25, 4
    %s27 = scalar_select %p26, 0, %s25
    %s28 = sadd.s32 1, %s17
    %s29 = scalar_select %p26, %s28, %s17
    %p30 = scmp.ge.s32.totalorder %s29, 3
    %s31 = scalar_select %p30, 0, %s29
    %s32 = sadd.s32 1, %s16
    %s33 = scalar_select %p30, %s32, %s16
    %p34 = scmp.ge.s32.totalorder %s33, 1
    %s35 = scalar_select %p34, 0, %s33
    %s36 = ssub.s32 %s16, %s35
    %p37 = scmp.eq.s32.totalorder %s36, 0
    %s39 = sadd.s32 %s38, 1
    %s40 = scalar_select %p37, %s38, %s39
    %p43 = pneg %p37
    %p44 = scmp.eq.s32.totalorder %s9, 11
    %p45 = por %p43, %p44
    %p46 = scmp.ne.s32.totalorder %s38, %s41
    %p47 = scmp.eq.s32.totalorder %s9, 0
    %p48 = por %p46, %p47
    %p49 = scmp.ne.s32.totalorder %s38, %s41
    %p50 = scmp.eq.s32.totalorder %s14, 11
    %p51 = por %p49, %p50
    %p52 = scmp.ne.s32.totalorder %s41, %s42
    %p53 = scmp.eq.s32.totalorder %s14, 0
    %p54 = por %p52, %p53
    %p55 = scmp.ne.s32.totalorder %s41, %s42
    %p56 = scmp.eq.s32.totalorder %s15, 11
    %p57 = por %p55, %p56
    %p59 = scmp.ne.s32.totalorder %s42, %s58
    %p60 = scmp.eq.s32.totalorder %s15, 0
    %p61 = por %p59, %p60
    %s62 = ssub.s32 %s17, %s31
    %s63 = ssub.s32 %s18, %s27
    %s64 = sor.u32 %s62, %s63
    %p65 = scmp.eq.s32.totalorder %s64, 0
    %s67 = sadd.s32 %s66, 1
    %s68 = scalar_select %p65, %s66, %s67
    %p71 = pneg %p65
    %p72 = scmp.eq.s32.totalorder %s9, 11
    %p73 = por %p71, %p72
    %p74 = scmp.ne.s32.totalorder %s66, %s69
    %p75 = scmp.eq.s32.totalorder %s9, 0
    %p76 = por %p74, %p75
    %p77 = scmp.ne.s32.totalorder %s66, %s69
    %p78 = scmp.eq.s32.totalorder %s14, 11
    %p79 = por %p77, %p78
    %p80 = scmp.ne.s32.totalorder %s69, %s70
    %p81 = scmp.eq.s32.totalorder %s14, 0
    %p82 = por %p80, %p81
    %p83 = scmp.ne.s32.totalorder %s69, %s70
    %p84 = scmp.eq.s32.totalorder %s15, 11
    %p85 = por %p83, %p84
    %p87 = scmp.ne.s32.totalorder %s70, %s86
    %p88 = scmp.eq.s32.totalorder %s15, 0
    %p89 = por %p87, %p88
    %s90 = ssub.s32 %s17, %s31
    %s91 = ssub.s32 %s18, %s27
    %s92 = sor.u32 %s90, %s91
    %p93 = scmp.eq.s32.totalorder %s92, 0
    %s95 = sadd.s32 %s94, 1
    %s96 = scalar_select %p93, %s94, %s95
    %p99 = pneg %p93
    %p100 = scmp.eq.s32.totalorder %s9, 11
    %p101 = por %p99, %p100
    %p102 = scmp.ne.s32.totalorder %s94, %s97
    %p103 = scmp.eq.s32.totalorder %s9, 0
    %p104 = por %p102, %p103
    %p105 = scmp.ne.s32.totalorder %s94, %s97
    %p106 = scmp.eq.s32.totalorder %s14, 11
    %p107 = por %p105, %p106
    %p108 = scmp.ne.s32.totalorder %s97, %s98
    %p109 = scmp.eq.s32.totalorder %s14, 0
    %p110 = por %p108, %p109
    %p111 = scmp.ne.s32.totalorder %s97, %s98
    %p112 = scmp.eq.s32.totalorder %s15, 11
    %p113 = por %p111, %p112
    %p115 = scmp.ne.s32.totalorder %s98, %s114
    %p116 = scmp.eq.s32.totalorder %s15, 0
    %p117 = por %p115, %p116
    %s118 = ssub.s32 %s17, %s31
    %s119 = ssub.s32 %s18, %s27
    %s120 = sor.u32 %s118, %s119
    %s121 = ssub.s32 %s16, %s35
    %s122 = sor.u32 %s120, %s121
    %p123 = scmp.eq.s32.totalorder %s122, 0
    %s125 = sadd.s32 %s124, 1
    %s126 = scalar_select %p123, %s124, %s125
    %p129 = pneg %p123
    %p130 = scmp.eq.s32.totalorder %s9, 11
    %p131 = por %p129, %p130
    %p132 = scmp.ne.s32.totalorder %s124, %s127
    %p133 = scmp.eq.s32.totalorder %s9, 0
    %p134 = por %p132, %p133
    %p135 = scmp.ne.s32.totalorder %s124, %s127
    %p136 = scmp.eq.s32.totalorder %s14, 11
    %p137 = por %p135, %p136
    %p138 = scmp.ne.s32.totalorder %s127, %s128
    %p139 = scmp.eq.s32.totalorder %s14, 0
    %p140 = por %p138, %p139
    %p141 = scmp.ne.s32.totalorder %s127, %s128
    %p142 = scmp.eq.s32.totalorder %s15, 11
    %p143 = por %p141, %p142
    %p145 = scmp.ne.s32.totalorder %s128, %s144
    %p146 = scmp.eq.s32.totalorder %s15, 0
    %p147 = por %p145, %p146
    %p148 = scmp.le.s32.totalorder 1, %s9
    %p149 = scmp.lt.s32.totalorder %s9, 13
    %p150 = pnand %p148, %p149
    %p151 = pneg %p150
    // Predicated region
    $region9: #{tpu_custom_call.1} parent=5 // pred_check
      _
    $region10: #{tpu_custom_call.1} parent=5 // pred_check_branch
      %153 = sbr.rel (%p150) target = $region12
    $region11: #{tpu_custom_call.1} parent=5 // pred_region
      %s154 = ssub.s32 %s9, 1
      // Predicated region
      $region13: #{tpu_custom_call.1} parent=11 // pred_check
        %p155 = pneg %p54
      $region14: #{tpu_custom_call.1} parent=11 // pred_check_branch
        %157 = sbr.rel (%p155) target = $region16
      $region15: #{tpu_custom_call.1} parent=11 // pred_region
        %s158 = smul.u32 2, %s19
        %p159 = scmp.lt.s32.totalorder %s158, 1
        %s160 = scalar_select %p159, %s158, 1
        %s161 = smul.addr %s160, 8
        %s162 = scalar_lea.vmem %s0, %s161
        %s163 = smul.u32 2, %s19
      $region16: #{tpu_custom_call.1} parent=11 // pred_fallthru
        _
    $region12: #{tpu_custom_call.1} parent=5 // pred_fallthru
      _
    %p164 = scmp.lt.s32.totalorder %s9, 12
    // Predicated region
    $region17: #{tpu_custom_call.1} parent=5 // pred_check
      %p165 = pneg %p164
    $region18: #{tpu_custom_call.1} parent=5 // pred_check_branch
      %167 = sbr.rel (%p165) target = $region20
    $region19: #{tpu_custom_call.1} parent=5 // pred_region
      // Predicated region
      $region21: #{tpu_custom_call.1} parent=19 // pred_check
        %p168 = pneg %p76
      $region22: #{tpu_custom_call.1} parent=19 // pred_check_branch
        %170 = sbr.rel (%p168) target = $region24
      $region23: #{tpu_custom_call.1} parent=19 // pred_region
        %p171 = scmp.lt.s32.totalorder %s17, 2
        %s172 = scalar_select %p171, %s17, 2
        %p173 = scmp.lt.s32.totalorder %s18, 3
        %s174 = scalar_select %p173, %s18, 3
        %s175 = smul.addr %s174, 4
        %s176 = smul.addr %s172, 16
        %s177 = sadd.s32 %s175, %s176
        %s178 = smul.addr %s177, 8
        %s179 = scalar_lea.vmem %s1, %s178
      $region24: #{tpu_custom_call.1} parent=19 // pred_fallthru
        _
      // Predicated region
      $region25: #{tpu_custom_call.1} parent=19 // pred_check
        %p180 = pneg %p104
      $region26: #{tpu_custom_call.1} parent=19 // pred_check_branch
        %182 = sbr.rel (%p180) target = $region28
      $region27: #{tpu_custom_call.1} parent=19 // pred_region
        %p183 = scmp.lt.s32.totalorder %s17, 2
        %s184 = scalar_select %p183, %s17, 2
        %p185 = scmp.lt.s32.totalorder %s18, 3
        %s186 = scalar_select %p185, %s18, 3
        %s187 = smul.addr %s184, 4
        %s188 = sadd.s32 %s186, %s187
        %s189 = scalar_lea.vmem %s2, %s188
      $region28: #{tpu_custom_call.1} parent=19 // pred_fallthru
        _
    $region20: #{tpu_custom_call.1} parent=5 // pred_fallthru
      _
    %p190 = scmp.le.s32.totalorder 1, %s9
    %p191 = scmp.lt.s32.totalorder %s9, 13
    %p192 = pnand %p190, %p191
    %p193 = pneg %p192
    // Predicated region
    $region29: #{tpu_custom_call.1} parent=5 // pred_check
      _
    $region30: #{tpu_custom_call.1} parent=5 // pred_check_branch
      %195 = sbr.rel (%p192) target = $region32
    $region31: #{tpu_custom_call.1} parent=5 // pred_region
      %s196 = ssub.s32 %s9, 1
      %s197 = smul.u32 2, %s19
      %p198 = scmp.lt.s32.totalorder %s197, 1
      %s199 = scalar_select %p198, %s197, 1
      %s200 = smul.addr %s199, 8
      %s201 = scalar_lea.vmem %s0, %s200
      %p202 = pneg %p54
      %p203 = pneg %p51
      %p204 = scmp.lt.s32.totalorder %s20, 2
      %s205 = scalar_select %p204, %s20, 2
      %p206 = scmp.lt.s32.totalorder %s21, 3
      %s207 = scalar_select %p206, %s21, 3
      %s208 = smul.addr %s207, 4
      %s209 = smul.addr %s205, 16
      %s210 = sadd.s32 %s208, %s209
      %s211 = smul.addr %s210, 8
      %s212 = scalar_lea.vmem %s1, %s211
      %p213 = pneg %p82
      %p214 = pneg %p79
      %p215 = scmp.lt.s32.totalorder %s20, 2
      %s216 = scalar_select %p215, %s20, 2
      %p217 = scmp.lt.s32.totalorder %s21, 3
      %s218 = scalar_select %p217, %s21, 3
      %s219 = smul.addr %s216, 4
      %s220 = sadd.s32 %s218, %s219
      %s221 = scalar_lea.vmem %s2, %s220
      %p222 = pneg %p110
      %p223 = pneg %p107
      %p224 = pneg %p140
      %p225 = pneg %p137
      %s226 = smul.u32 2, %s19
      %p227 = scmp.lt.s32.totalorder %s20, 2
      %s228 = scalar_select %p227, %s20, 2
      %p229 = scmp.lt.s32.totalorder %s21, 3
      %s230 = scalar_select %p229, %s21, 3
      %p231 = scmp.lt.s32.totalorder %s226, 1
      %s232 = scalar_select %p231, %s226, 1
      %s233 = smul.addr %s230, 2
      %s234 = sadd.s32 %s232, %s233
      %s235 = smul.addr %s228, 8
      %s236 = sadd.s32 %s234, %s235
      %s237 = smul.addr %s236, 8
      %s238 = scalar_lea.vmem %s3, %s237
      %s239 = smul.u32 2, %s19
      %p240 = scmp.lt.s32.totalorder %s239, 1
      %s241 = scalar_select %p240, %s239, 1
      %s242 = smul.addr %s241, 8
      %s243 = scalar_lea.vmem %s0, %s242
      %s244 = smul.u32 2, %s19
      %p245 = scmp.lt.s32.totalorder %s20, 2
      %s246 = scalar_select %p245, %s20, 2
      %p247 = scmp.lt.s32.totalorder %s21, 3
      %s248 = scalar_select %p247, %s21, 3
      %s249 = smul.addr %s248, 4
      %s250 = smul.addr %s246, 16
      %s251 = sadd.s32 %s249, %s250
      %s252 = smul.addr %s251, 8
      %s253 = scalar_lea.vmem %s1, %s252
      %p254 = scmp.lt.s32.totalorder %s20, 2
      %s255 = scalar_select %p254, %s20, 2
      %p256 = scmp.lt.s32.totalorder %s21, 3
      %s257 = scalar_select %p256, %s21, 3
      %s258 = smul.addr %s255, 4
      %s259 = sadd.s32 %s257, %s258
      %s260 = scalar_lea.vmem %s2, %s259
      %s261 = smul.u32 2, %s19
      %p262 = scmp.lt.s32.totalorder %s20, 2
      %s263 = scalar_select %p262, %s20, 2
      %p264 = scmp.lt.s32.totalorder %s21, 3
      %s265 = scalar_select %p264, %s21, 3
      %p266 = scmp.lt.s32.totalorder %s261, 1
      %s267 = scalar_select %p266, %s261, 1
      %s268 = smul.addr %s265, 2
      %s269 = sadd.s32 %s267, %s268
      %s270 = smul.addr %s263, 8
      %s271 = sadd.s32 %s269, %s270
      %s272 = smul.addr %s271, 8
      %s273 = scalar_lea.vmem %s3, %s272
      %s274 = smul.u32 2, %s19
      %v275 = vld [vmem:[%s243] sm:$0xff]
      %v276 = vld [vmem:[%s243 + $0x8] sm:$0xff]
      %v277 = vld [vmem:[%s253] sm:$0xff]
      %v278 = vld [vmem:[%s253 + $0x8] sm:$0xff]
      %v279 = vld [vmem:[%s253 + $0x10] sm:$0xff]
      %v280 = vld [vmem:[%s253 + $0x18] sm:$0xff]
      %v281 = vld [vmem:[%s260] sm:$0x1]
      %v283 = vperm.slane %v281, 0
      %vm285 = vcmask 261120
      %v287 = vsel %vm285, %v275, 0
      %v290 = vsel %vm285, %v276, 0
      %292 = vmatpush.msra.mxu0 0.0
      %293 = vmatpush.msra.mxu0 0.0
      %294 = vmatpush.msra.mxu0 0.0
      %295 = vmatpush.msra.mxu0 0.0
      %296 = vmatpush.msra.mxu0 0.0
      %297 = vmatpush.msra.mxu0 0.0
      %298 = vmatpush.msra.mxu0 0.0
      %299 = vmatpush.msra.mxu0 0.0
      %300 = vmatpush.msra.mxu0 0.0
      %301 = vmatpush.msra.mxu0 0.0
      %302 = vmatpush.msra.mxu0 0.0
      %303 = vmatpush.msra.mxu0 0.0
      %304 = vmatpush.msra.mxu0 %v280
      %305 = vmatpush.msra.mxu0 %v279
      %306 = vmatpush.msra.mxu0 %v278
      %307 = vmatpush.msra.mxu0 %v277
      %308 = vmatmul.f32.gmra.mxu0 %v287
      %v309 = vpop.f32.mrf.mxu0
      %v310 = vadd.f32 %v283, %v309
      %311 = vmatmul.f32.gmra.mxu0 %v290
      %v312 = vpop.f32.mrf.mxu0
      %v313 = vadd.f32 %v283, %v312
      %314 = vdwg.mxu0
      %vm315 = vcmask 64512
      %316 = vst.msk [vmem:[%s273] sm:$0xff] %vm315, %v310
      %317 = vst.msk [vmem:[%s273 + $0x8] sm:$0xff] %vm315, %v313
      %s318 = smul.u32 2, %s19
      %p319 = scmp.lt.s32.totalorder %s20, 2
      %s320 = scalar_select %p319, %s20, 2
      %p321 = scmp.lt.s32.totalorder %s21, 3
      %s322 = scalar_select %p321, %s21, 3
      %p323 = scmp.lt.s32.totalorder %s318, 1
      %s324 = scalar_select %p323, %s318, 1
      %s325 = smul.addr %s322, 2
      %s326 = sadd.s32 %s324, %s325
      %s327 = smul.addr %s320, 8
      %s328 = sadd.s32 %s326, %s327
      %s329 = smul.addr %s328, 8
      %s330 = scalar_lea.vmem %s3, %s329
      // Predicated region
      $region33: #{tpu_custom_call.1} parent=31 // pred_check
        %p331 = pneg %p137
      $region34: #{tpu_custom_call.1} parent=31 // pred_check_branch
        %333 = sbr.rel (%p331) target = $region36
      $region35: #{tpu_custom_call.1} parent=31 // pred_region
        %s334 = smul.u32 2, %s19
      $region36: #{tpu_custom_call.1} parent=31 // pred_fallthru
        _
    $region32: #{tpu_custom_call.1} parent=5 // pred_fallthru
      _
    %p335 = scmp.le.s32.totalorder 2, %s9
    // Predicated region
    $region37: #{tpu_custom_call.1} parent=5 // pred_check
      %p336 = pneg %p335
    $region38: #{tpu_custom_call.1} parent=5 // pred_check_branch
      %338 = sbr.rel (%p336) target = $region40
    $region39: #{tpu_custom_call.1} parent=5 // pred_region
      %s339 = ssub.s32 %s9, 2
      // Predicated region
      $region41: #{tpu_custom_call.1} parent=39 // pred_check
        %p340 = pneg %p143
      $region42: #{tpu_custom_call.1} parent=39 // pred_check_branch
        %342 = sbr.rel (%p340) target = $region44
      $region43: #{tpu_custom_call.1} parent=39 // pred_region
        %s343 = smul.u32 2, %s22
        %p344 = scmp.lt.s32.totalorder %s23, 2
        %s345 = scalar_select %p344, %s23, 2
        %p346 = scmp.lt.s32.totalorder %s24, 3
        %s347 = scalar_select %p346, %s24, 3
        %p348 = scmp.lt.s32.totalorder %s343, 1
        %s349 = scalar_select %p348, %s343, 1
        %s350 = smul.addr %s347, 2
        %s351 = sadd.s32 %s349, %s350
        %s352 = smul.addr %s345, 8
        %s353 = sadd.s32 %s351, %s352
        %s354 = smul.addr %s353, 8
        %s355 = scalar_lea.vmem %s3, %s354
      $region44: #{tpu_custom_call.1} parent=39 // pred_fallthru
        _
    $region40: #{tpu_custom_call.1} parent=5 // pred_fallthru
      _
  $region6: #{tpu_custom_call.1} parent=0 // loop_footer
    %s13 = sadd.s32 1, %s9
  $region7: #{tpu_custom_call.1} parent=0 // loop_footer_branch
    %8 = sbr.rel target = $region3
  $region8: #{tpu_custom_call.1} parent=0 // loop_exit
    _

</llo_original>
